<compile_context>
chip_gen: v6e
topology: v6e:2x2x1
jax: 0.10.0
libtpu: 0.0.40
codegen_flags: <defaults>
</compile_context>

<pallas_src>
import jax
import jax.numpy as jnp
import numpy as np
from jax.experimental import pallas as pl
from jax.experimental.pallas import tpu as pltpu


# ---------------------------------------------------------------------------
# Tile selection helpers
# ---------------------------------------------------------------------------
def _pick_batch_tile(B, cap=64):
    """Largest multiple-of-8 divisor of B (<= cap), preferring >=2 grid steps
    along the (parallel) batch axis so a 2-TC chip (v7x) keeps both cores busy.
    Falls back to the full batch (block == full dim is always a legal block)."""
    for want_two_steps in (True, False):
        for bt in range(min(B, cap), 0, -1):
            if B % bt == 0 and bt % 8 == 0 and (not want_two_steps or B // bt >= 2):
                return bt
    return B


def _pick_seq_tile(bt, S, H, itemsize, budget_bytes=6 * 1024 * 1024):
    """Sequence tile so a double-buffered (bt, ts, H) x-block stays well inside
    the scoped VMEM limit on every TPU generation (v5e 16 MiB default scope,
    v7x 64 MiB physical)."""
    if bt * S * H * itemsize <= budget_bytes:
        return S
    max_ts = max(1, budget_bytes // (bt * H * itemsize))
    for mult in (128, 8):
        for ts in range(min(S, max_ts), 0, -1):
            if S % ts == 0 and ts % mult == 0:
                return ts
    return S  # odd S: fall back to the full sequence (legal full-dim block)


# ---------------------------------------------------------------------------
# Kernel
# ---------------------------------------------------------------------------
def _attn_kernel(x_ref, w_ref, o_ref, m_sc, l_sc, acc_sc):
    # x_ref: (Bt, Ts, H) native dtype    w_ref: (1, H)    o_ref: (Bt, H)
    # scratch: m_sc (Bt,1) running max, l_sc (Bt,1) denom, acc_sc (Bt,H) f32.
    s_idx = pl.program_id(1)

    @pl.when(s_idx == 0)
    def _init():
        # relu(scores) >= 0, so 0 is a valid initial running max (no -inf math).
        m_sc[...] = jnp.zeros_like(m_sc)
        l_sc[...] = jnp.zeros_like(l_sc)
        acc_sc[...] = jnp.zeros_like(acc_sc)

    x = x_ref[...]                                   # (Bt, Ts, H) native dtype
    w = w_ref[...].astype(x.dtype)                   # (1, H), broadcasts over x

    # Lane-dense scores: contract H (lane axis) -> (Bt, Ts), accumulate in f32.
    scores = jnp.sum((x * w).astype(jnp.float32), axis=-1)
    scores = jnp.maximum(scores, 0.0)                # relu

    # Online softmax over the sequence (grid axis 1, "arbitrary").
    m_prev = m_sc[...]                                            # (Bt, 1)
    m_new = jnp.maximum(m_prev, jnp.max(scores, axis=-1, keepdims=True))
    alpha = jnp.exp(m_prev - m_new)                               # (Bt, 1)
    p = jnp.exp(scores - m_new)                                   # (Bt, Ts)

    l_sc[...] = alpha * l_sc[...] + jnp.sum(p, axis=-1, keepdims=True)

    # Weighted sum over the sequence tile: multiply in native dtype,
    # accumulate in f32 (sublane reduce over Ts) -> (Bt, H).
    contrib = jnp.sum((x * p.astype(x.dtype)[..., None]).astype(jnp.float32),
                      axis=1)
    acc_sc[...] = alpha * acc_sc[...] + contrib
    m_sc[...] = m_new

    @pl.when(s_idx == pl.num_programs(1) - 1)
    def _finalize():
        inv_l = pl.reciprocal(l_sc[...], approx=True)   # EUP slot, off the VPU path
        o_ref[...] = (acc_sc[...] * inv_l).astype(o_ref.dtype)


# ---------------------------------------------------------------------------
# Wrapper
# ---------------------------------------------------------------------------
def attn_forward(x, weights):
    """x: (B, S, H), weights: (H, 1) -> (B, H)."""
    B, S, H = x.shape
    # Lane-major weight row; tiny, stays VMEM-resident across all grid steps.
    w_row = weights.reshape(1, H).astype(jnp.float32)

    bt = _pick_batch_tile(B)
    ts = _pick_seq_tile(bt, S, H, x.dtype.itemsize)
    grid = (B // bt, S // ts)

    return pl.pallas_call(
        _attn_kernel,
        out_shape=jax.ShapeDtypeStruct((B, H), x.dtype),
        grid_spec=pltpu.PrefetchScalarGridSpec(
            num_scalar_prefetch=0,
            grid=grid,
            in_specs=[
                pl.BlockSpec((bt, ts, H), lambda b, s: (b, s, 0)),
                pl.BlockSpec((1, H), lambda b, s: (0, 0)),
            ],
            out_specs=pl.BlockSpec((bt, H), lambda b, s: (b, 0)),
            scratch_shapes=[
                pltpu.VMEM((bt, 1), jnp.float32),   # running max
                pltpu.VMEM((bt, 1), jnp.float32),   # running denominator
                pltpu.VMEM((bt, H), jnp.float32),   # f32 output accumulator
            ],
        ),
        compiler_params=pltpu.CompilerParams(
            dimension_semantics=("parallel", "arbitrary"),
            vmem_limit_bytes=32 * 1024 * 1024,
        ),
    )(x, w_row)


def attn_reference(x, weights):
    # Pure-JAX reference mirroring the PyTorch forward exactly.
    scores = jnp.einsum("bsh,ho->bso", x, weights)[..., 0]       # (B, S)
    attn = jax.nn.softmax(jax.nn.relu(scores), axis=-1)          # (B, S)
    return jnp.sum(x * attn[..., None], axis=1)                  # (B, H)


if __name__ == "__main__":
    key = jax.random.PRNGKey(0)
    k_x, k_w = jax.random.split(key)

    batch, seq, hidden = 2, 8, 32

    # Deterministic parameter init mimicking nn.init.uniform_(-stdv, stdv).
    stdv = 1.0 / np.sqrt(hidden)
    weights = jax.random.uniform(k_w, (hidden, 1), dtype=jnp.float32,
                                 minval=-stdv, maxval=stdv)
    x = jax.random.normal(k_x, (batch, seq, hidden), dtype=jnp.float32)

    out = jax.block_until_ready(attn_forward(x, weights))
    ref = attn_reference(x, weights)

    # Tolerance accounts for the approximate (EUP) reciprocal in the softmax
    # normalization; structural errors would be orders of magnitude larger.
    np.testing.assert_allclose(np.asarray(out), np.asarray(ref),
                               rtol=2e-3, atol=2e-3)
    print("KERNEL_OK")
</pallas_src>

<mosaic_0001>
module attributes {stable_mosaic.version = 11 : i64} {
  func.func @_attn_kernel(%arg0: i32, %arg1: i32, %arg2: memref<2x8x32xf32, #tpu.memory_space<vmem>>, %arg3: memref<1x32xf32, #tpu.memory_space<vmem>>, %arg4: memref<2x32xf32, #tpu.memory_space<vmem>>, %arg5: memref<2x1xf32, #tpu.memory_space<vmem>>, %arg6: memref<2x1xf32, #tpu.memory_space<vmem>>, %arg7: memref<2x32xf32, #tpu.memory_space<vmem>>) attributes {dimension_semantics = [#tpu.dimension_semantics<parallel>, #tpu.dimension_semantics<arbitrary>], iteration_bounds = array<i64: 1, 1>, scalar_prefetch = 0 : i64, scratch_operands = 3 : i64, tpu.core_type = #tpu.core_type<tc>, window_params = [{transform_indices = @transform_0, window_bounds = array<i64: 2, 8, 32>}, {pipeline_mode = #tpu.pipeline_mode<synchronous>, transform_indices = @transform_1, window_bounds = array<i64: 1, 32>}, {transform_indices = @transform_2, window_bounds = array<i64: 2, 32>}]} {
    %c0_i32 = arith.constant 0 : i32
    %0 = arith.cmpi eq, %arg1, %c0_i32 : i32
    %1 = arith.extui %0 : i1 to i32
    %c0_i32_0 = arith.constant 0 : i32
    %2 = arith.cmpi ne, %1, %c0_i32_0 : i32
    scf.if %2 {
      %cst_23 = arith.constant 0.000000e+00 : f32
      %39 = vector.broadcast %cst_23 : f32 to vector<2x1xf32>
      %c0_24 = arith.constant 0 : index
      %c0_25 = arith.constant 0 : index
      %40 = vector.load %arg5[%c0_24, %c0_25] : memref<2x1xf32, #tpu.memory_space<vmem>>, vector<2x1xf32>
      tpu.vector_store %arg5[%c0_24, %c0_25], %39 {strides = array<i32>} : memref<2x1xf32, #tpu.memory_space<vmem>>, vector<2x1xf32>,
      %cst_26 = arith.constant 0.000000e+00 : f32
      %41 = vector.broadcast %cst_26 : f32 to vector<2x1xf32>
      %c0_27 = arith.constant 0 : index
      %c0_28 = arith.constant 0 : index
      %42 = vector.load %arg6[%c0_27, %c0_28] : memref<2x1xf32, #tpu.memory_space<vmem>>, vector<2x1xf32>
      tpu.vector_store %arg6[%c0_27, %c0_28], %41 {strides = array<i32>} : memref<2x1xf32, #tpu.memory_space<vmem>>, vector<2x1xf32>,
      %cst_29 = arith.constant 0.000000e+00 : f32
      %43 = vector.broadcast %cst_29 : f32 to vector<2x32xf32>
      %c0_30 = arith.constant 0 : index
      %c0_31 = arith.constant 0 : index
      %44 = vector.load %arg7[%c0_30, %c0_31] : memref<2x32xf32, #tpu.memory_space<vmem>>, vector<2x32xf32>
      tpu.vector_store %arg7[%c0_30, %c0_31], %43 {strides = array<i32>} : memref<2x32xf32, #tpu.memory_space<vmem>>, vector<2x32xf32>,
    } else {
    }
    %c0 = arith.constant 0 : index
    %c0_1 = arith.constant 0 : index
    %c0_2 = arith.constant 0 : index
    %3 = vector.load %arg2[%c0, %c0_1, %c0_2] : memref<2x8x32xf32, #tpu.memory_space<vmem>>, vector<2x8x32xf32>
    %c0_3 = arith.constant 0 : index
    %c0_4 = arith.constant 0 : index
    %4 = vector.load %arg3[%c0_3, %c0_4] : memref<1x32xf32, #tpu.memory_space<vmem>>, vector<1x32xf32>
    %5 = vector.shape_cast %4 : vector<1x32xf32> to vector<1x1x32xf32>
    %6 = vector.broadcast %5 : vector<1x1x32xf32> to vector<2x8x32xf32>
    %7 = arith.mulf %3, %6 : vector<2x8x32xf32>
    %cst = arith.constant dense<0.000000e+00> : vector<2x8xf32>
    %8 = vector.multi_reduction <add>, %7, %cst [2] : vector<2x8x32xf32> to vector<2x8xf32>
    %cst_5 = arith.constant 0.000000e+00 : f32
    %9 = vector.broadcast %cst_5 : f32 to vector<2x8xf32>
    %10 = arith.maximumf %8, %9 : vector<2x8xf32>
    %c0_6 = arith.constant 0 : index
    %c0_7 = arith.constant 0 : index
    %11 = vector.load %arg5[%c0_6, %c0_7] : memref<2x1xf32, #tpu.memory_space<vmem>>, vector<2x1xf32>
    %cst_8 = arith.constant dense<0xFF800000> : vector<2xf32>
    %12 = vector.multi_reduction <maximumf>, %10, %cst_8 [1] : vector<2x8xf32> to vector<2xf32>
    %13 = vector.shape_cast %12 : vector<2xf32> to vector<2x1xf32>
    %14 = arith.maximumf %11, %13 : vector<2x1xf32>
    %15 = arith.subf %11, %14 : vector<2x1xf32>
    %16 = math.exp %15 : vector<2x1xf32>
    %17 = vector.broadcast %14 : vector<2x1xf32> to vector<2x8xf32>
    %18 = arith.subf %10, %17 : vector<2x8xf32>
    %19 = math.exp %18 : vector<2x8xf32>
    %c0_9 = arith.constant 0 : index
    %c0_10 = arith.constant 0 : index
    %20 = vector.load %arg6[%c0_9, %c0_10] : memref<2x1xf32, #tpu.memory_space<vmem>>, vector<2x1xf32>
    %21 = arith.mulf %16, %20 : vector<2x1xf32>
    %cst_11 = arith.constant dense<0.000000e+00> : vector<2xf32>
    %22 = vector.multi_reduction <add>, %19, %cst_11 [1] : vector<2x8xf32> to vector<2xf32>
    %23 = vector.shape_cast %22 : vector<2xf32> to vector<2x1xf32>
    %24 = arith.addf %21, %23 : vector<2x1xf32>
    %c0_12 = arith.constant 0 : index
    %c0_13 = arith.constant 0 : index
    %25 = vector.load %arg6[%c0_12, %c0_13] : memref<2x1xf32, #tpu.memory_space<vmem>>, vector<2x1xf32>
    tpu.vector_store %arg6[%c0_12, %c0_13], %24 {strides = array<i32>} : memref<2x1xf32, #tpu.memory_space<vmem>>, vector<2x1xf32>,
    %26 = vector.shape_cast %19 : vector<2x8xf32> to vector<2x8x1xf32>
    %27 = vector.broadcast %26 : vector<2x8x1xf32> to vector<2x8x32xf32>
    %28 = arith.mulf %3, %27 : vector<2x8x32xf32>
    %cst_14 = arith.constant dense<0.000000e+00> : vector<2x32xf32>
    %29 = vector.multi_reduction <add>, %28, %cst_14 [1] : vector<2x8x32xf32> to vector<2x32xf32>
    %c0_15 = arith.constant 0 : index
    %c0_16 = arith.constant 0 : index
    %30 = vector.load %arg7[%c0_15, %c0_16] : memref<2x32xf32, #tpu.memory_space<vmem>>, vector<2x32xf32>
    %31 = vector.broadcast %16 : vector<2x1xf32> to vector<2x32xf32>
    %32 = arith.mulf %31, %30 : vector<2x32xf32>
    %33 = arith.addf %32, %29 : vector<2x32xf32>
    %c0_17 = arith.constant 0 : index
    %c0_18 = arith.constant 0 : index
    %34 = vector.load %arg7[%c0_17, %c0_18] : memref<2x32xf32, #tpu.memory_space<vmem>>, vector<2x32xf32>
    tpu.vector_store %arg7[%c0_17, %c0_18], %33 {strides = array<i32>} : memref<2x32xf32, #tpu.memory_space<vmem>>, vector<2x32xf32>,
    %c0_19 = arith.constant 0 : index
    %c0_20 = arith.constant 0 : index
    %35 = vector.load %arg5[%c0_19, %c0_20] : memref<2x1xf32, #tpu.memory_space<vmem>>, vector<2x1xf32>
    tpu.vector_store %arg5[%c0_19, %c0_20], %14 {strides = array<i32>} : memref<2x1xf32, #tpu.memory_space<vmem>>, vector<2x1xf32>,
    %c0_i32_21 = arith.constant 0 : i32
    %36 = arith.cmpi eq, %arg1, %c0_i32_21 : i32
    %37 = arith.extui %36 : i1 to i32
    %c0_i32_22 = arith.constant 0 : i32
    %38 = arith.cmpi ne, %37, %c0_i32_22 : i32
    scf.if %38 {
      %c0_23 = arith.constant 0 : index
      %c0_24 = arith.constant 0 : index
      %39 = vector.load %arg6[%c0_23, %c0_24] : memref<2x1xf32, #tpu.memory_space<vmem>>, vector<2x1xf32>
      %40 = tpu.reciprocal %39 {approx = true} : vector<2x1xf32> -> vector<2x1xf32>
      %c0_25 = arith.constant 0 : index
      %c0_26 = arith.constant 0 : index
      %41 = vector.load %arg7[%c0_25, %c0_26] : memref<2x32xf32, #tpu.memory_space<vmem>>, vector<2x32xf32>
      %42 = vector.broadcast %40 : vector<2x1xf32> to vector<2x32xf32>
      %43 = arith.mulf %41, %42 : vector<2x32xf32>
      %c0_27 = arith.constant 0 : index
      %c0_28 = arith.constant 0 : index
      %44 = vector.load %arg4[%c0_27, %c0_28] : memref<2x32xf32, #tpu.memory_space<vmem>>, vector<2x32xf32>
      tpu.vector_store %arg4[%c0_27, %c0_28], %43 {strides = array<i32>} : memref<2x32xf32, #tpu.memory_space<vmem>>, vector<2x32xf32>,
    } else {
    }
    return
  }
  func.func @transform_0(%arg0: i32, %arg1: i32) -> (i32, i32, i32) {
    %c0_i32 = arith.constant 0 : i32
    %c0_i32_0 = arith.constant 0 : i32
    return %arg0, %arg1, %c0_i32 : i32, i32, i32
  }
  func.func @transform_1(%arg0: i32, %arg1: i32) -> (i32, i32) {
    %c0_i32 = arith.constant 0 : i32
    %c0_i32_0 = arith.constant 0 : i32
    %c0_i32_1 = arith.constant 0 : i32
    return %c0_i32, %c0_i32_0 : i32, i32
  }
  func.func @transform_2(%arg0: i32, %arg1: i32) -> (i32, i32) {
    %c0_i32 = arith.constant 0 : i32
    %c0_i32_0 = arith.constant 0 : i32
    return %arg0, %c0_i32 : i32, i32
  }
}

</mosaic_0001>

<llo_original>
// kernel: tpu_custom_call.1
$region0: #{tpu_custom_call.1}
  #allocation0 [shape = 'u32[]', space=smem, size = 0x4, offset = 0x4, fixed_abs, tag = 'smem constant byte address 0x4 - core index']
  #allocation1 [shape = 'u32[144,128]{1,0:T(1,128)}', space=vmem, size = 0x12000, scoped, tag = 'internal scratch']
  #allocation2 [shape = 'f32[2,1]{1,0:T(2,128)}', space=vmem, size = 0x400, scoped, tag = 'scratch operand']
  #allocation3 [shape = 'f32[2,1]{1,0:T(2,128)}', space=vmem, size = 0x400, scoped, tag = 'scratch operand']
  #allocation4 [shape = 'f32[2,32]{1,0:T(2,128)}', space=vmem, size = 0x400, scoped, tag = 'scratch operand']
  %s0 = inlined_call_operand.hbm [shape: f32[2,8,32], index: 0, kind: input, shape index: {}]
  %s1 = inlined_call_operand.vmem [shape: f32[1,32], index: 1, kind: input, shape index: {}]
  %s2 = inlined_call_operand.hbm [shape: f32[2,32], index: 2, kind: output, shape index: {}]
  %s3 = sld [smem:[#allocation0]]
  $region30: #{tpu_custom_call.1} parent=0
    _
  %s5 = ssub.s32 1, %s3
  %s6 = scalar_select 0, %s5, %s3
  $region1: #{tpu_custom_call.1} parent=0
    #allocation5 [shape = 'u8[8192]{0}', space=vmem, size = 0x2000, scoped, tag = 'input window, operand 0, single buffered']
    #allocation6 [shape = 's32[1]{0}', space=sflag, size = 0x4, scoped, tag = 'scoped memory for tpu_custom_call.1']
    #allocation7 [shape = 's32[1]{0}', space=sflag, size = 0x4, scoped, tag = 'scoped memory for tpu_custom_call.1']
    #allocation8 [shape = 'u8[1024]{0}', space=vmem, size = 0x400, scoped, tag = 'output window, operand 0, single buffered']
    %7 = vsyncpa [#allocation6], 0
    %8 = vsyncpa [#allocation7], 0
    // Predicated region
    $region2: #{tpu_custom_call.1} parent=1 // pred_check
      _
    $region3: #{tpu_custom_call.1} parent=1 // pred_check_branch
      %10 = sbr.rel (0) target = $region5
    $region4: #{tpu_custom_call.1} parent=1 // pred_region
      %s12 = ssub.s32 256, 256
      %13 = vsyncadd [#allocation6], %s12
      %s14 = sshll.u32 [#allocation5], 4
      %s15 = int_to_ptr.vmem [resolvable:$true] %s14
      %20 = dma.hbm_to_vmem [thread:$0]  %s0, 256, %s15, [#allocation6], 128, 128, 8
    $region5: #{tpu_custom_call.1} parent=1 // pred_fallthru
      _
    // Predicated region
    $region6: #{tpu_custom_call.1} parent=1 // pred_check
      _
    $region7: #{tpu_custom_call.1} parent=1 // pred_check_branch
      %22 = sbr.rel (0) target = $region9
    $region8: #{tpu_custom_call.1} parent=1 // pred_region
      _
    $region9: #{tpu_custom_call.1} parent=1 // pred_fallthru
      _
    // Predicated region
    $region10: #{tpu_custom_call.1} parent=1 // pred_check
      _
    $region11: #{tpu_custom_call.1} parent=1 // pred_check_branch
      %24 = sbr.rel (0) target = $region13
    $region12: #{tpu_custom_call.1} parent=1 // pred_region
      %25 = dma.done [#allocation6], 256
    $region13: #{tpu_custom_call.1} parent=1 // pred_fallthru
      _
    %p26 = scmp.eq.s32.totalorder 0, 0
    // Predicated region
    $region14: #{tpu_custom_call.1} parent=1 // pred_check
      %p27 = pneg %p26
    $region15: #{tpu_custom_call.1} parent=1 // pred_check_branch
      %29 = sbr.rel (%p27) target = $region17
    $region16: #{tpu_custom_call.1} parent=1 // pred_region
      %vm30 = vcmask 1024
      %31 = vst.msk [vmem:[#allocation2] sm:$0x3] %vm30, 0.0
      %32 = vst.msk [vmem:[#allocation3] sm:$0x3] %vm30, 0.0
      %vm33 = vcmask 254976
      %34 = vst.msk [vmem:[#allocation4] sm:$0x3] %vm33, 0.0
    $region17: #{tpu_custom_call.1} parent=1 // pred_fallthru
      _
    %v35 = vld [vmem:[#allocation5] sm:$0xff]
    %v36 = vld [vmem:[#allocation5 + $0x8] sm:$0xff]
    %v37 = vld [vmem:[%s1] sm:$0x1]
    %v39 = vlaneseq
    %v40 = vshrl.u32 %v39, 7
    %v41 = vsub.s32 0, %v40
    %v42 = vrot.slane %v37, %v41
    %v44 = vmul.f32 %v35, %v42
    %v45 = vmul.f32 %v36, %v42
    %vm46 = vcmask 261120
    %v47 = vsel %vm46, %v44, 0.0
    %48 = vadd.xlane.f32.xlu0 %v47
    %v49 = vpop.xlane.xlu0 %48
    %v50 = vsel %vm46, %v45, 0.0
    %51 = vadd.xlane.f32.xlu0 %v50
    %v52 = vpop.xlane.xlu0 %51
    %v53 = vmax.f32 %v49, 0.0
    %v54 = vmax.f32 %v52, 0.0
    %v55 = vld [vmem:[#allocation2] sm:$0x3]
    %v58 = vlaneseq
    %v59 = vand.u32 %v58, 127
    %v60 = vlaneseq
    %v61 = vshrl.u32 %v60, 7
    %v62 = vsub.s32 %v59, %v61
    %v63 = vrot.slane %v53, %v62
    %v64 = vlaneseq
    %v65 = vshrl.u32 %v64, 7
    %v66 = vsub.s32 %v59, %v65
    %v67 = vrot.slane %v54, %v66
    %vm68 = vcmask 1041409
    %v69 = vsel %vm68, %v67, %v63
    %vm71 = vcmask 58368
    %v72 = vsel %vm71, %v69, -inf
    %73 = vmax.xlane.f32.xlu0 %v72
    %v74 = vpop.xlane.xlu0 %73
    %v75 = vmax.f32 %v55, %v74
    %v76 = vsub.f32 %v55, %v75
    %v77 = vmul.f32 %v76, 1.442695
    %v78 = vpow.pop %v77
    %80 = vset.pattern.permute.xlu0 0
    %81 = vperm.xlu0 %80, %v75
    %v82 = vpop.permute.xlu0 %81
    %v83 = vlaneseq
    %v84 = vshrl.u32 %v83, 7
    %v85 = vsub.s32 0, %v84
    %v86 = vrot.slane %v82, %v85
    %v87 = vlaneseq
    %v88 = vshrl.u32 %v87, 7
    %v89 = vsub.s32 1, %v88
    %v90 = vrot.slane %v82, %v89
    %v93 = vsub.f32 %v53, %v86
    %v94 = vsub.f32 %v54, %v90
    %v95 = vmul.f32 %v93, 1.442695
    %v96 = vpow.pop %v95
    %v97 = vmul.f32 %v94, 1.442695
    %v98 = vpow.pop %v97
    %v99 = vld [vmem:[#allocation3] sm:$0x3]
    %v100 = vmul.f32 %v78, %v99
    %103 = vset.pattern.permute.xlu0 0
    %104 = vperm.xlu0 %103, %v96
    %v105 = vpop.permute.xlu0 %104
    %106 = vset.pattern.permute.xlu0 0
    %107 = vperm.xlu0 %106, %v98
    %v108 = vpop.permute.xlu0 %107
    %v109 = vlaneseq
    %v110 = vshrl.u32 %v109, 7
    %v111 = vsub.s32 %v59, %v110
    %v112 = vrot.slane %v105, %v111
    %v113 = vlaneseq
    %v114 = vshrl.u32 %v113, 7
    %v115 = vsub.s32 %v59, %v114
    %v116 = vrot.slane %v108, %v115
    %v117 = vsel %vm68, %v116, %v112
    %v119 = vsel %vm71, %v117, 0.0
    %120 = vadd.xlane.f32.xlu0 %v119
    %v121 = vpop.xlane.xlu0 %120
    %v122 = vadd.f32 %v100, %v121
    %vm123 = vcmask 1024
    %124 = vst.msk [vmem:[#allocation3] sm:$0x3] %vm123, %v122
    %v127 = vmul.f32 %v35, %v105
    %v128 = vmul.f32 %v36, %v108
    %v129 = vsel %vm46, %v127, 0.0
    %v130 = vrot.slane %v129, 4
    %v131 = vadd.f32 %v129, %v130
    %v132 = vrot.slane %v131, 2
    %v133 = vadd.f32 %v131, %v132
    %v134 = vrot.slane %v133, 1
    %v135 = vadd.f32 %v133, %v134
    %v136 = vsel %vm46, %v128, 0.0
    %v137 = vrot.slane %v136, 4
    %v138 = vadd.f32 %v136, %v137
    %v139 = vrot.slane %v138, 2
    %v140 = vadd.f32 %v138, %v139
    %v141 = vrot.slane %v140, 1
    %v142 = vadd.f32 %v140, %v141
    %v143 = vld [vmem:[#allocation4] sm:$0x3]
    %145 = vset.pattern.permute.xlu0 0
    %146 = vperm.xlu0 %145, %v78
    %v147 = vpop.permute.xlu0 %146
    %v149 = vmul.f32 %v147, %v143
    %v152 = vsel %vm68, %v142, %v135
    %v154 = vadd.f32 %v149, %v152
    %vm155 = vcmask 254976
    %156 = vst.msk [vmem:[#allocation4] sm:$0x3] %vm155, %v154
    %157 = vst.msk [vmem:[#allocation2] sm:$0x3] %vm123, %v75
    // Predicated region
    $region18: #{tpu_custom_call.1} parent=1 // pred_check
      %p158 = pneg %p26
    $region19: #{tpu_custom_call.1} parent=1 // pred_check_branch
      %160 = sbr.rel (%p158) target = $region21
    $region20: #{tpu_custom_call.1} parent=1 // pred_region
      %v161 = vld [vmem:[#allocation3] sm:$0x3]
      %v162 = vrcp.pop %v161
      %v163 = vld [vmem:[#allocation4] sm:$0x3]
      %165 = vset.pattern.permute.xlu0 0
      %166 = vperm.xlu0 %165, %v162
      %v167 = vpop.permute.xlu0 %166
      %v169 = vmul.f32 %v163, %v167
      %170 = vst.msk [vmem:[#allocation8] sm:$0x3] %vm155, %v169
    $region21: #{tpu_custom_call.1} parent=1 // pred_fallthru
      _
    // Predicated region
    $region22: #{tpu_custom_call.1} parent=1 // pred_check
      _
    $region23: #{tpu_custom_call.1} parent=1 // pred_check_branch
      %172 = sbr.rel (0) target = $region25
    $region24: #{tpu_custom_call.1} parent=1 // pred_region
      %s174 = ssub.s32 32, 32
      %175 = vsyncadd [#allocation7], %s174
      %s177 = sshll.u32 [#allocation8], 4
      %s178 = int_to_ptr.vmem [resolvable:$true] %s177
      %180 = dma.vmem_to_hbm [thread:$0]  %s178, 32, %s2, [#allocation7]
    $region25: #{tpu_custom_call.1} parent=1 // pred_fallthru
      _
    // Predicated region
    $region26: #{tpu_custom_call.1} parent=1 // pred_check
      _
    $region27: #{tpu_custom_call.1} parent=1 // pred_check_branch
      %182 = sbr.rel (0) target = $region29
    $region28: #{tpu_custom_call.1} parent=1 // pred_region
      %183 = dma.done [#allocation7], 32
    $region29: #{tpu_custom_call.1} parent=1 // pred_fallthru
      _
    %184 = vsyncpa [#allocation6], 1
    %185 = vsyncpa [#allocation7], 1

</llo_original>
